<compile_context>
chip_gen: v7x
topology: tpu7x:2x2x1
jax: 0.10.0
libtpu: 0.0.40
codegen_flags: <defaults>
</compile_context>

<pallas_src>
import jax
import jax.numpy as jnp
import numpy as np
from jax.experimental import pallas as pl
from jax.experimental.pallas import tpu as pltpu

# ---------------- model hyper-parameters (module defaults, small) -------------
L_MAX = 1                                       # RotPendulumModelSimple fixes L_max = 1
NUM_REP = 16
N_SCALARS = 16
R_DIM = 16                                      # used by the (missing) message blocks
REP = NUM_REP * L_MAX                           # 16
DIM = N_SCALARS + REP * 2                       # 48  (original MLP input width)
DIM_CAT = N_SCALARS + REP * 4                   # 80  (fused [scalars | c*x | s*x] width)
HIDDEN = DIM * 3                                # 144 (MLP(dim, [dim*3], 2))


def _round_up(x, m):
    return ((x + m - 1) // m) * m


# ----------------------------- geometry helpers --------------------------------
def get_cos_sin(pos, l_max):
    """Per-node (cos(k*theta), sin(k*theta)) for k = 1..l_max, shape (N, 2*l_max)."""
    theta = jnp.arctan2(pos[:, 1], pos[:, 0])
    ks = jnp.arange(1, l_max + 1, dtype=pos.dtype)
    ang = theta[:, None] * ks[None, :]
    return jnp.concatenate([jnp.cos(ang), jnp.sin(ang)], axis=1)


def get_rot(pos, l_max):
    """Full SO(2) irrep rotation matrices (N, L_max, 2, 2) - reference/test only."""
    theta = jnp.arctan2(pos[:, 1], pos[:, 0])
    ks = jnp.arange(1, l_max + 1, dtype=pos.dtype)
    ang = theta[:, None] * ks[None, :]
    c, s = jnp.cos(ang), jnp.sin(ang)
    row0 = jnp.stack([c, -s], axis=-1)
    row1 = jnp.stack([s, c], axis=-1)
    return jnp.stack([row0, row1], axis=-2)


# ----------------------------- Pallas kernel ------------------------------------
def so2_outv_kernel(xs_ref, xr_ref, cs_ref, w1_ref, b1_ref, w2_ref, b2_ref, o_ref):
    # Upcast-on-load: storage may be bf16, all VPU math stays f32 (v5e-safe).
    xs = xs_ref[...].astype(jnp.float32)                     # (TN, 16)
    xr = xr_ref[...].astype(jnp.float32)                     # (TN, 32) interleaved (rep, m)
    cs = cs_ref[...].astype(jnp.float32)                     # (TN, 2*L_MAX) [cos... | sin...]

    c = cs[:, :L_MAX]                                        # (TN, L_MAX)
    s = cs[:, L_MAX:2 * L_MAX]
    if L_MAX > 1:                                            # trace-time branch; dead at L_MAX=1
        c = jnp.tile(jnp.repeat(c, 2, axis=1), (1, NUM_REP))
        s = jnp.tile(jnp.repeat(s, 2, axis=1), (1, NUM_REP))

    # Rotation + MLP layer 1 fused into ONE K=80 bf16 MXU pass with f32 acc:
    #   y @ W1r == (c*x_rot) @ W1r + (s*x_rot) @ (J @ W1r)   (J folded into W_cat
    #   at parameter-prep time), so no de-interleave / lane shuffle is needed here.
    x_cat = jnp.concatenate([xs, xr * c, xr * s], axis=1).astype(jnp.bfloat16)  # (TN, 80)
    h = jnp.dot(x_cat, w1_ref[...], preferred_element_type=jnp.float32) + b1_ref[...]
    h = jnp.where(h > 0, h, 0.01 * h)                        # leaky_relu(0.01), f32
    m = jnp.dot(h.astype(jnp.bfloat16), w2_ref[...],
                preferred_element_type=jnp.float32) + b2_ref[...]               # (TN, 2)

    # out = m @ rot_theta[:, 0]   (per-node 1x2 @ 2x2; uses the k=1 frequency only)
    c1 = cs[:, 0:1]
    s1 = cs[:, L_MAX:L_MAX + 1]
    m0 = m[:, 0:1]
    m1 = m[:, 1:2]
    o_ref[...] = jnp.concatenate([m0 * c1 + m1 * s1, m1 * c1 - m0 * s1], axis=1)


# ----------------------------- parameter prep (one-time) ------------------------
def prepare_so2_outv_params(params):
    """One-time repack of the SO2OutV MLP weights.

    Folds the per-pair 90-degree helper J (J[2j,:]=row 2j+1, J[2j+1,:]=-row 2j) into
    the rotational block of W1 and concatenates [W1_scalars | W1_rot | J@W1_rot] so
    the kernel does a single K=80 MXU pass and never de-interleaves x_rot.  Weights
    are stored bf16 (MXU-native on v5e/v6e/v7x); biases stay f32."""
    w1, b1, w2, b2 = params["W1"], params["b1"], params["W2"], params["b2"]
    w1s = w1[:N_SCALARS]                                     # (16, HIDDEN)
    w1r = w1[N_SCALARS:]                                     # (32, HIDDEN), interleaved (rep, m)
    pairs = w1r.reshape(REP, 2, HIDDEN)
    w1rj = jnp.stack([pairs[:, 1, :], -pairs[:, 0, :]], axis=1).reshape(2 * REP, HIDDEN)
    w_cat = jnp.concatenate([w1s, w1r, w1rj], axis=0).astype(jnp.bfloat16)   # (80, HIDDEN)
    return {"W_cat": w_cat,
            "b1": b1.reshape(1, HIDDEN).astype(jnp.float32),
            "W2": w2.astype(jnp.bfloat16),
            "b2": b2.reshape(1, 2).astype(jnp.float32)}


# ----------------------------- tiling helper -------------------------------------
def _choose_node_tiling(n, tile_n):
    """Pick (tile, n_pad): tiles are multiples of 128; single-tile problems >=256
    rows are split in two and odd multi-tile grids rounded up to even so both v7x
    TensorCores stay busy (harmless on single-TC v5e/v6e)."""
    n_pad = _round_up(max(n, 1), 128)
    k = pl.cdiv(n_pad, tile_n)
    if k == 1:
        if n_pad >= 256:
            k = 2
    elif k % 2 == 1:
        k += 1
    tile = _round_up(pl.cdiv(n_pad, k), 128)
    n_pad = _round_up(n_pad, tile)
    return tile, n_pad


def _pad_rows(a, n_pad):
    n = a.shape[0]
    return a if n == n_pad else jnp.pad(a, ((0, n_pad - n), (0, 0)))


# ----------------------------- Pallas wrapper ------------------------------------
def so2_outv_pallas(x_scalar, x_rot, cos_sin, prepped, *, tile_n=2048,
                    storage_dtype=jnp.float32):
    """SO2OutV.forward hot path: one pallas_call tiled over nodes.

    x_scalar (N,16), x_rot (N,32) and cos_sin (N,2*L_max) go straight to the kernel
    as separate lane-full blocks (no packing pass); only row zero-padding up to the
    tile multiple happens in the wrapper.  storage_dtype=bf16 halves per-node HBM
    bytes (upstream blocks should produce bf16 directly in production); cos/sin stay
    f32 (2 lanes, negligible bytes, keeps the rotation accurate)."""
    n = x_scalar.shape[0]
    tile, n_pad = _choose_node_tiling(n, tile_n)
    assert tile % 128 == 0

    xs_p = _pad_rows(x_scalar.astype(storage_dtype), n_pad)
    xr_p = _pad_rows(x_rot.astype(storage_dtype), n_pad)
    cs_p = _pad_rows(cos_sin.astype(jnp.float32), n_pad)

    out = pl.pallas_call(
        so2_outv_kernel,
        out_shape=jax.ShapeDtypeStruct((n_pad, 2), jnp.float32),
        grid=(n_pad // tile,),
        in_specs=[
            pl.BlockSpec((tile, N_SCALARS), lambda i: (i, 0)),       # x_scalar
            pl.BlockSpec((tile, 2 * REP), lambda i: (i, 0)),         # x_rot (interleaved)
            pl.BlockSpec((tile, 2 * L_MAX), lambda i: (i, 0)),       # cos/sin
            pl.BlockSpec((DIM_CAT, HIDDEN), lambda i: (0, 0)),       # fused W1 (bf16)
            pl.BlockSpec((1, HIDDEN), lambda i: (0, 0)),             # b1 (f32)
            pl.BlockSpec((HIDDEN, 2), lambda i: (0, 0)),             # W2 (bf16)
            pl.BlockSpec((1, 2), lambda i: (0, 0)),                  # b2 (f32)
        ],
        out_specs=pl.BlockSpec((tile, 2), lambda i: (i, 0)),
        compiler_params=pltpu.CompilerParams(
            dimension_semantics=("parallel",)),
    )(xs_p, xr_p, cs_p, prepped["W_cat"], prepped["b1"], prepped["W2"], prepped["b2"])
    return out[:n]


# ----------------------- pure-JAX reference (test-only) --------------------------
def so2_outv_ref(x_scalar, x_rot, rot_theta, params):
    n = x_scalar.shape[0]
    rot_inv = jnp.swapaxes(rot_theta, 2, 3)
    xr = x_rot.reshape(n, NUM_REP, L_MAX, 2)
    xr = jnp.einsum('njkm,nkml->njkl', xr, rot_inv).reshape(n, -1)
    x = jnp.concatenate([x_scalar, xr], axis=1)
    h = x @ params["W1"] + params["b1"]
    h = jnp.where(h > 0, h, 0.01 * h)
    m = h @ params["W2"] + params["b2"]
    return jnp.einsum('nm,nml->nl', m, rot_theta[:, 0])


# ----------------------------- full model forward --------------------------------
def rot_pendulum_features(v, force, is_moving, pos, edge_index, emb_weights):
    """torch.no_grad() preprocessing + node-embedding stand-in."""
    pos = pos - pos.mean(axis=0)
    row, col = edge_index
    edge_vec = pos[row] - pos[col]
    distance = jnp.linalg.norm(edge_vec, axis=1)     # noqa: F841 (feeds missing blocks)
    # TODO(synk): Node_embedding_pendulum / EqBlockSimple2 / SO2LayerNorm /
    # besel_linspace definitions were not provided; a fixed deterministic linear
    # stand-in produces x = {'scalar', 'rot'}; edge_vec/distance would feed those blocks.
    feats = jnp.concatenate([v, force, is_moving], axis=1)              # (N, 5)
    x_scalar = feats @ emb_weights["ws"]
    x_rot = feats @ emb_weights["wr"]
    return x_scalar, x_rot, pos


def rot_pendulum_forward(v, force, is_moving, pos, edge_index, prepped, emb_weights,
                         *, tile_n=2048, storage_dtype=jnp.float32):
    x_scalar, x_rot, pos_c = rot_pendulum_features(v, force, is_moving, pos,
                                                   edge_index, emb_weights)
    cos_sin = get_cos_sin(pos_c, L_MAX)
    return so2_outv_pallas(x_scalar, x_rot, cos_sin, prepped,
                           tile_n=tile_n, storage_dtype=storage_dtype)


# ------------------------------------ main ---------------------------------------
if __name__ == "__main__":
    key = jax.random.PRNGKey(0)
    k_w1, k_b1, k_w2, k_b2, k_emb, k_small, k_big = jax.random.split(key, 7)

    # SO2OutV MLP parameters: Linear(48, 144) -> leaky_relu -> Linear(144, 2)
    params = {
        "W1": jax.random.normal(k_w1, (DIM, HIDDEN), jnp.float32) / np.sqrt(DIM),
        "b1": jax.random.normal(k_b1, (HIDDEN,), jnp.float32) * 0.01,
        "W2": jax.random.normal(k_w2, (HIDDEN, 2), jnp.float32) / np.sqrt(HIDDEN),
        "b2": jax.random.normal(k_b2, (2,), jnp.float32) * 0.01,
    }
    prepped = prepare_so2_outv_params(params)

    # stand-in node-embedding weights built ONCE (not per forward call)
    k1, k2 = jax.random.split(k_emb)
    emb_w = {
        "ws": jax.random.normal(k1, (5, N_SCALARS), jnp.float32) * 0.3,
        "wr": jax.random.normal(k2, (5, 2 * REP), jnp.float32) * 0.3,
    }

    def make_inputs(k, n):
        kv, kf, km, kp = jax.random.split(k, 4)
        v = jax.random.normal(kv, (n, 2), jnp.float32)
        force = jax.random.normal(kf, (n, 2), jnp.float32)
        is_moving = (jax.random.uniform(km, (n, 1)) > 0.5).astype(jnp.float32)
        pos = jax.random.normal(kp, (n, 2), jnp.float32)
        idx = jnp.arange(n, dtype=jnp.int32)
        edge_index = jnp.stack([idx, (idx + 1) % n], axis=0)            # ring graph
        return v, force, is_moving, pos, edge_index

    # Tolerances are relaxed vs a pure-f32 reference because the MXU operands are
    # bf16 (f32 accumulation) — per the perf review this is intentional.
    TOL = dict(rtol=5e-2, atol=5e-2)

    # --- small demo (N=16): single 128-row tile ---
    v, force, is_moving, pos, edge_index = make_inputs(k_small, 16)
    out = jax.block_until_ready(
        rot_pendulum_forward(v, force, is_moving, pos, edge_index, prepped, emb_w))
    xs_s, xr_s, pc_s = rot_pendulum_features(v, force, is_moving, pos, edge_index, emb_w)
    ref = so2_outv_ref(xs_s, xr_s, get_rot(pc_s, L_MAX), params)
    np.testing.assert_allclose(np.asarray(out), np.asarray(ref), **TOL)

    # --- multi-tile grid check (N=1024 -> 2 node tiles of 512: even grid for v7x) ---
    v2, f2, m2, p2, e2 = make_inputs(k_big, 1024)
    out2 = jax.block_until_ready(
        rot_pendulum_forward(v2, f2, m2, p2, e2, prepped, emb_w))
    xs2, xr2, pc2 = rot_pendulum_features(v2, f2, m2, p2, e2, emb_w)
    ref2 = so2_outv_ref(xs2, xr2, get_rot(pc2, L_MAX), params)
    np.testing.assert_allclose(np.asarray(out2), np.asarray(ref2), **TOL)

    # --- bf16 HBM-storage path (halves per-node bytes on v6e/v7x; f32 VPU math) ---
    out_bf16 = jax.block_until_ready(
        so2_outv_pallas(xs2, xr2, get_cos_sin(pc2, L_MAX), prepped,
                        storage_dtype=jnp.bfloat16))
    np.testing.assert_allclose(np.asarray(out_bf16), np.asarray(ref2),
                               rtol=1e-1, atol=1e-1)
    assert bool(jnp.all(jnp.isfinite(out_bf16)))

    print("KERNEL_OK")
</pallas_src>

<mosaic_0001>
module attributes {stable_mosaic.version = 11 : i64} {
  func.func @so2_outv_kernel(%arg0: i32, %arg1: memref<128x16xf32, #tpu.memory_space<vmem>>, %arg2: memref<128x32xf32, #tpu.memory_space<vmem>>, %arg3: memref<128x2xf32, #tpu.memory_space<vmem>>, %arg4: memref<80x144xbf16, #tpu.memory_space<vmem>>, %arg5: memref<1x144xf32, #tpu.memory_space<vmem>>, %arg6: memref<144x2xbf16, #tpu.memory_space<vmem>>, %arg7: memref<1x2xf32, #tpu.memory_space<vmem>>, %arg8: memref<128x2xf32, #tpu.memory_space<vmem>>) attributes {dimension_semantics = [#tpu.dimension_semantics<parallel>], iteration_bounds = array<i64: 1>, scalar_prefetch = 0 : i64, scratch_operands = 0 : i64, tpu.core_type = #tpu.core_type<tc>, window_params = [{transform_indices = @transform_0, window_bounds = array<i64: 128, 16>}, {transform_indices = @transform_1, window_bounds = array<i64: 128, 32>}, {transform_indices = @transform_2, window_bounds = array<i64: 128, 2>}, {pipeline_mode = #tpu.pipeline_mode<synchronous>, transform_indices = @transform_3, window_bounds = array<i64: 80, 144>}, {pipeline_mode = #tpu.pipeline_mode<synchronous>, transform_indices = @transform_4, window_bounds = array<i64: 1, 144>}, {pipeline_mode = #tpu.pipeline_mode<synchronous>, transform_indices = @transform_5, window_bounds = array<i64: 144, 2>}, {pipeline_mode = #tpu.pipeline_mode<synchronous>, transform_indices = @transform_6, window_bounds = array<i64: 1, 2>}, {transform_indices = @transform_7, window_bounds = array<i64: 128, 2>}]} {
    %c0 = arith.constant 0 : index
    %c0_0 = arith.constant 0 : index
    %0 = vector.load %arg1[%c0, %c0_0] : memref<128x16xf32, #tpu.memory_space<vmem>>, vector<128x16xf32>
    %c0_1 = arith.constant 0 : index
    %c0_2 = arith.constant 0 : index
    %1 = vector.load %arg2[%c0_1, %c0_2] : memref<128x32xf32, #tpu.memory_space<vmem>>, vector<128x32xf32>
    %c0_3 = arith.constant 0 : index
    %c0_4 = arith.constant 0 : index
    %2 = vector.load %arg3[%c0_3, %c0_4] : memref<128x2xf32, #tpu.memory_space<vmem>>, vector<128x2xf32>
    %3 = vector.extract_strided_slice %2 {offsets = [0, 0], sizes = [128, 1], strides = [1, 1]} : vector<128x2xf32> to vector<128x1xf32>
    %4 = vector.extract_strided_slice %2 {offsets = [0, 1], sizes = [128, 1], strides = [1, 1]} : vector<128x2xf32> to vector<128x1xf32>
    %5 = vector.broadcast %3 : vector<128x1xf32> to vector<128x32xf32>
    %6 = arith.mulf %1, %5 : vector<128x32xf32>
    %7 = vector.broadcast %4 : vector<128x1xf32> to vector<128x32xf32>
    %8 = arith.mulf %1, %7 : vector<128x32xf32>
    %9 = tpu.concatenate %0, %6, %8 in 1 : vector<128x16xf32>, vector<128x32xf32>, vector<128x32xf32> -> vector<128x80xf32>
    %10 = arith.truncf %9 : vector<128x80xf32> to vector<128x80xbf16>
    %c0_5 = arith.constant 0 : index
    %c0_6 = arith.constant 0 : index
    %11 = vector.load %arg4[%c0_5, %c0_6] : memref<80x144xbf16, #tpu.memory_space<vmem>>, vector<80x144xbf16>
    %cst = arith.constant dense<0.000000e+00> : vector<128x144xf32>
    %12 = tpu.matmul %10, %11, %cst {dimension_numbers = #tpu.dot_dimension_numbers<[1], [0], [0], [1], [0, 0, 1, 1], [], []>} : vector<128x80xbf16>, vector<80x144xbf16>, vector<128x144xf32> -> vector<128x144xf32>
    %c0_7 = arith.constant 0 : index
    %c0_8 = arith.constant 0 : index
    %13 = vector.load %arg5[%c0_7, %c0_8] : memref<1x144xf32, #tpu.memory_space<vmem>>, vector<1x144xf32>
    %14 = vector.broadcast %13 : vector<1x144xf32> to vector<128x144xf32>
    %15 = arith.addf %12, %14 : vector<128x144xf32>
    %cst_9 = arith.constant 0.000000e+00 : f32
    %16 = vector.broadcast %cst_9 : f32 to vector<128x144xf32>
    %17 = arith.cmpf ogt, %15, %16 : vector<128x144xf32>
    %cst_10 = arith.constant 0.00999999977 : f32
    %18 = vector.broadcast %cst_10 : f32 to vector<128x144xf32>
    %19 = arith.mulf %18, %15 : vector<128x144xf32>
    %20 = arith.select %17, %15, %19 : vector<128x144xi1>, vector<128x144xf32>
    %21 = arith.truncf %20 : vector<128x144xf32> to vector<128x144xbf16>
    %c0_11 = arith.constant 0 : index
    %c0_12 = arith.constant 0 : index
    %22 = vector.load %arg6[%c0_11, %c0_12] : memref<144x2xbf16, #tpu.memory_space<vmem>>, vector<144x2xbf16>
    %cst_13 = arith.constant dense<0.000000e+00> : vector<128x2xf32>
    %23 = tpu.matmul %21, %22, %cst_13 {dimension_numbers = #tpu.dot_dimension_numbers<[1], [0], [0], [1], [0, 0, 1, 1], [], []>} : vector<128x144xbf16>, vector<144x2xbf16>, vector<128x2xf32> -> vector<128x2xf32>
    %c0_14 = arith.constant 0 : index
    %c0_15 = arith.constant 0 : index
    %24 = vector.load %arg7[%c0_14, %c0_15] : memref<1x2xf32, #tpu.memory_space<vmem>>, vector<1x2xf32>
    %25 = vector.broadcast %24 : vector<1x2xf32> to vector<128x2xf32>
    %26 = arith.addf %23, %25 : vector<128x2xf32>
    %27 = vector.extract_strided_slice %2 {offsets = [0, 0], sizes = [128, 1], strides = [1, 1]} : vector<128x2xf32> to vector<128x1xf32>
    %28 = vector.extract_strided_slice %2 {offsets = [0, 1], sizes = [128, 1], strides = [1, 1]} : vector<128x2xf32> to vector<128x1xf32>
    %29 = vector.extract_strided_slice %26 {offsets = [0, 0], sizes = [128, 1], strides = [1, 1]} : vector<128x2xf32> to vector<128x1xf32>
    %30 = vector.extract_strided_slice %26 {offsets = [0, 1], sizes = [128, 1], strides = [1, 1]} : vector<128x2xf32> to vector<128x1xf32>
    %31 = arith.mulf %29, %27 : vector<128x1xf32>
    %32 = arith.mulf %30, %28 : vector<128x1xf32>
    %33 = arith.addf %31, %32 : vector<128x1xf32>
    %34 = arith.mulf %30, %27 : vector<128x1xf32>
    %35 = arith.mulf %29, %28 : vector<128x1xf32>
    %36 = arith.subf %34, %35 : vector<128x1xf32>
    %37 = tpu.concatenate %33, %36 in 1 : vector<128x1xf32>, vector<128x1xf32> -> vector<128x2xf32>
    %c0_16 = arith.constant 0 : index
    %c0_17 = arith.constant 0 : index
    %38 = vector.load %arg8[%c0_16, %c0_17] : memref<128x2xf32, #tpu.memory_space<vmem>>, vector<128x2xf32>
    tpu.vector_store %arg8[%c0_16, %c0_17], %37 {strides = array<i32>} : memref<128x2xf32, #tpu.memory_space<vmem>>, vector<128x2xf32>,
    return
  }
  func.func @transform_0(%arg0: i32) -> (i32, i32) {
    %c0_i32 = arith.constant 0 : i32
    %c0_i32_0 = arith.constant 0 : i32
    return %arg0, %c0_i32 : i32, i32
  }
  func.func @transform_1(%arg0: i32) -> (i32, i32) {
    %c0_i32 = arith.constant 0 : i32
    %c0_i32_0 = arith.constant 0 : i32
    return %arg0, %c0_i32 : i32, i32
  }
  func.func @transform_2(%arg0: i32) -> (i32, i32) {
    %c0_i32 = arith.constant 0 : i32
    %c0_i32_0 = arith.constant 0 : i32
    return %arg0, %c0_i32 : i32, i32
  }
  func.func @transform_3(%arg0: i32) -> (i32, i32) {
    %c0_i32 = arith.constant 0 : i32
    %c0_i32_0 = arith.constant 0 : i32
    %c0_i32_1 = arith.constant 0 : i32
    return %c0_i32, %c0_i32_0 : i32, i32
  }
  func.func @transform_4(%arg0: i32) -> (i32, i32) {
    %c0_i32 = arith.constant 0 : i32
    %c0_i32_0 = arith.constant 0 : i32
    %c0_i32_1 = arith.constant 0 : i32
    return %c0_i32, %c0_i32_0 : i32, i32
  }
  func.func @transform_5(%arg0: i32) -> (i32, i32) {
    %c0_i32 = arith.constant 0 : i32
    %c0_i32_0 = arith.constant 0 : i32
    %c0_i32_1 = arith.constant 0 : i32
    return %c0_i32, %c0_i32_0 : i32, i32
  }
  func.func @transform_6(%arg0: i32) -> (i32, i32) {
    %c0_i32 = arith.constant 0 : i32
    %c0_i32_0 = arith.constant 0 : i32
    %c0_i32_1 = arith.constant 0 : i32
    return %c0_i32, %c0_i32_0 : i32, i32
  }
  func.func @transform_7(%arg0: i32) -> (i32, i32) {
    %c0_i32 = arith.constant 0 : i32
    %c0_i32_0 = arith.constant 0 : i32
    return %arg0, %c0_i32 : i32, i32
  }
}

</mosaic_0001>

<llo_original>
// kernel: tpu_custom_call.1
$region0: #{tpu_custom_call.1}
  #allocation0 [shape = 'u32[]', space=smem, size = 0x4, offset = 0x4, fixed_abs, tag = 'smem constant byte address 0x4 - core index']
  #allocation1 [shape = 'u32[144,128]{1,0:T(1,128)}', space=vmem, size = 0x12000, scoped, tag = 'internal scratch']
  %s0 = inlined_call_operand.vmem [shape: f32[128,16], index: 0, kind: input, shape index: {}]
  %s1 = inlined_call_operand.vmem [shape: f32[128,32], index: 1, kind: input, shape index: {}]
  %s2 = inlined_call_operand.vmem [shape: f32[128,2], index: 2, kind: input, shape index: {}]
  %s3 = inlined_call_operand.vmem [shape: bf16[80,144], index: 3, kind: input, shape index: {}]
  %s4 = inlined_call_operand.vmem [shape: f32[1,144], index: 4, kind: input, shape index: {}]
  %s5 = inlined_call_operand.vmem [shape: bf16[144,2], index: 5, kind: input, shape index: {}]
  %s6 = inlined_call_operand.vmem [shape: f32[1,2], index: 6, kind: input, shape index: {}]
  %s7 = inlined_call_operand.vmem [shape: f32[128,2], index: 7, kind: output, shape index: {}]
  %s8 = sld [smem:[#allocation0]]
  $region38: #{tpu_custom_call.1} parent=0
    _
  %s10 = ssub.s32 1, %s8
  %s11 = scalar_select 0, %s10, %s8
  // Predicated region
  $region2: #{tpu_custom_call.1} parent=0 // pred_check
    _
  $region3: #{tpu_custom_call.1} parent=0 // pred_check_branch
    %13 = sbr.rel (0) target = $region5
  $region4: #{tpu_custom_call.1} parent=0 // pred_region
    _
  $region5: #{tpu_custom_call.1} parent=0 // pred_fallthru
    _
  // Predicated region
  $region6: #{tpu_custom_call.1} parent=0 // pred_check
    _
  $region7: #{tpu_custom_call.1} parent=0 // pred_check_branch
    %15 = sbr.rel (0) target = $region9
  $region8: #{tpu_custom_call.1} parent=0 // pred_region
    _
  $region9: #{tpu_custom_call.1} parent=0 // pred_fallthru
    _
  // Predicated region
  $region10: #{tpu_custom_call.1} parent=0 // pred_check
    _
  $region11: #{tpu_custom_call.1} parent=0 // pred_check_branch
    %17 = sbr.rel (0) target = $region13
  $region12: #{tpu_custom_call.1} parent=0 // pred_region
    _
  $region13: #{tpu_custom_call.1} parent=0 // pred_fallthru
    _
  // Predicated region
  $region14: #{tpu_custom_call.1} parent=0 // pred_check
    _
  $region15: #{tpu_custom_call.1} parent=0 // pred_check_branch
    %19 = sbr.rel (0) target = $region17
  $region16: #{tpu_custom_call.1} parent=0 // pred_region
    _
  $region17: #{tpu_custom_call.1} parent=0 // pred_fallthru
    _
  // Predicated region
  $region18: #{tpu_custom_call.1} parent=0 // pred_check
    _
  $region19: #{tpu_custom_call.1} parent=0 // pred_check_branch
    %21 = sbr.rel (0) target = $region21
  $region20: #{tpu_custom_call.1} parent=0 // pred_region
    _
  $region21: #{tpu_custom_call.1} parent=0 // pred_fallthru
    _
  // Predicated region
  $region22: #{tpu_custom_call.1} parent=0 // pred_check
    _
  $region23: #{tpu_custom_call.1} parent=0 // pred_check_branch
    %23 = sbr.rel (0) target = $region25
  $region24: #{tpu_custom_call.1} parent=0 // pred_region
    _
  $region25: #{tpu_custom_call.1} parent=0 // pred_fallthru
    _
  // Predicated region
  $region26: #{tpu_custom_call.1} parent=0 // pred_check
    _
  $region27: #{tpu_custom_call.1} parent=0 // pred_check_branch
    %25 = sbr.rel (0) target = $region29
  $region28: #{tpu_custom_call.1} parent=0 // pred_region
    _
  $region29: #{tpu_custom_call.1} parent=0 // pred_fallthru
    _
  %v27 = vld [vmem:[%s0] sm:$0xff]
  %v28 = vld [vmem:[%s0 + $0x8] sm:$0xff]
  %v29 = vld [vmem:[%s0 + $0x10] sm:$0xff]
  %v30 = vld [vmem:[%s0 + $0x18] sm:$0xff]
  %v31 = vld [vmem:[%s0 + $0x20] sm:$0xff]
  %v32 = vld [vmem:[%s0 + $0x28] sm:$0xff]
  %v33 = vld [vmem:[%s0 + $0x30] sm:$0xff]
  %v34 = vld [vmem:[%s0 + $0x38] sm:$0xff]
  %v35 = vld [vmem:[%s0 + $0x40] sm:$0xff]
  %v36 = vld [vmem:[%s0 + $0x48] sm:$0xff]
  %v37 = vld [vmem:[%s0 + $0x50] sm:$0xff]
  %v38 = vld [vmem:[%s0 + $0x58] sm:$0xff]
  %v39 = vld [vmem:[%s0 + $0x60] sm:$0xff]
  %v40 = vld [vmem:[%s0 + $0x68] sm:$0xff]
  %v41 = vld [vmem:[%s0 + $0x70] sm:$0xff]
  %v42 = vld [vmem:[%s0 + $0x78] sm:$0xff]
  %v43 = vld [vmem:[%s1] sm:$0xff]
  %v44 = vld [vmem:[%s1 + $0x8] sm:$0xff]
  %v45 = vld [vmem:[%s1 + $0x10] sm:$0xff]
  %v46 = vld [vmem:[%s1 + $0x18] sm:$0xff]
  %v47 = vld [vmem:[%s1 + $0x20] sm:$0xff]
  %v48 = vld [vmem:[%s1 + $0x28] sm:$0xff]
  %v49 = vld [vmem:[%s1 + $0x30] sm:$0xff]
  %v50 = vld [vmem:[%s1 + $0x38] sm:$0xff]
  %v51 = vld [vmem:[%s1 + $0x40] sm:$0xff]
  %v52 = vld [vmem:[%s1 + $0x48] sm:$0xff]
  %v53 = vld [vmem:[%s1 + $0x50] sm:$0xff]
  %v54 = vld [vmem:[%s1 + $0x58] sm:$0xff]
  %v55 = vld [vmem:[%s1 + $0x60] sm:$0xff]
  %v56 = vld [vmem:[%s1 + $0x68] sm:$0xff]
  %v57 = vld [vmem:[%s1 + $0x70] sm:$0xff]
  %v58 = vld [vmem:[%s1 + $0x78] sm:$0xff]
  %v59 = vld [vmem:[%s2] sm:$0xff]
  %v60 = vld [vmem:[%s2 + $0x8] sm:$0xff]
  %v61 = vld [vmem:[%s2 + $0x10] sm:$0xff]
  %v62 = vld [vmem:[%s2 + $0x18] sm:$0xff]
  %v63 = vld [vmem:[%s2 + $0x20] sm:$0xff]
  %v64 = vld [vmem:[%s2 + $0x28] sm:$0xff]
  %v65 = vld [vmem:[%s2 + $0x30] sm:$0xff]
  %v66 = vld [vmem:[%s2 + $0x38] sm:$0xff]
  %v67 = vld [vmem:[%s2 + $0x40] sm:$0xff]
  %v68 = vld [vmem:[%s2 + $0x48] sm:$0xff]
  %v69 = vld [vmem:[%s2 + $0x50] sm:$0xff]
  %v70 = vld [vmem:[%s2 + $0x58] sm:$0xff]
  %v71 = vld [vmem:[%s2 + $0x60] sm:$0xff]
  %v72 = vld [vmem:[%s2 + $0x68] sm:$0xff]
  %v73 = vld [vmem:[%s2 + $0x70] sm:$0xff]
  %v74 = vld [vmem:[%s2 + $0x78] sm:$0xff]
  %76 = vset.pattern.permute.xlu0 0
  %77 = vperm.xlu0 %76, %v59
  %v78 = vpop.permute.xlu0 %77
  %81 = vset.pattern.permute.xlu0 0
  %82 = vperm.xlu0 %81, %v60
  %v83 = vpop.permute.xlu0 %82
  %86 = vset.pattern.permute.xlu0 0
  %87 = vperm.xlu0 %86, %v61
  %v88 = vpop.permute.xlu0 %87
  %91 = vset.pattern.permute.xlu0 0
  %92 = vperm.xlu0 %91, %v62
  %v93 = vpop.permute.xlu0 %92
  %96 = vset.pattern.permute.xlu0 0
  %97 = vperm.xlu0 %96, %v63
  %v98 = vpop.permute.xlu0 %97
  %101 = vset.pattern.permute.xlu0 0
  %102 = vperm.xlu0 %101, %v64
  %v103 = vpop.permute.xlu0 %102
  %106 = vset.pattern.permute.xlu0 0
  %107 = vperm.xlu0 %106, %v65
  %v108 = vpop.permute.xlu0 %107
  %111 = vset.pattern.permute.xlu0 0
  %112 = vperm.xlu0 %111, %v66
  %v113 = vpop.permute.xlu0 %112
  %116 = vset.pattern.permute.xlu0 0
  %117 = vperm.xlu0 %116, %v67
  %v118 = vpop.permute.xlu0 %117
  %121 = vset.pattern.permute.xlu0 0
  %122 = vperm.xlu0 %121, %v68
  %v123 = vpop.permute.xlu0 %122
  %126 = vset.pattern.permute.xlu0 0
  %127 = vperm.xlu0 %126, %v69
  %v128 = vpop.permute.xlu0 %127
  %131 = vset.pattern.permute.xlu0 0
  %132 = vperm.xlu0 %131, %v70
  %v133 = vpop.permute.xlu0 %132
  %136 = vset.pattern.permute.xlu0 0
  %137 = vperm.xlu0 %136, %v71
  %v138 = vpop.permute.xlu0 %137
  %141 = vset.pattern.permute.xlu0 0
  %142 = vperm.xlu0 %141, %v72
  %v143 = vpop.permute.xlu0 %142
  %146 = vset.pattern.permute.xlu0 0
  %147 = vperm.xlu0 %146, %v73
  %v148 = vpop.permute.xlu0 %147
  %151 = vset.pattern.permute.xlu0 0
  %152 = vperm.xlu0 %151, %v74
  %v153 = vpop.permute.xlu0 %152
  %v155 = vmul.f32 %v43, %v78
  %v156 = vmul.f32 %v44, %v83
  %v157 = vmul.f32 %v45, %v88
  %v158 = vmul.f32 %v46, %v93
  %v159 = vmul.f32 %v47, %v98
  %v160 = vmul.f32 %v48, %v103
  %v161 = vmul.f32 %v49, %v108
  %v162 = vmul.f32 %v50, %v113
  %v163 = vmul.f32 %v51, %v118
  %v164 = vmul.f32 %v52, %v123
  %v165 = vmul.f32 %v53, %v128
  %v166 = vmul.f32 %v54, %v133
  %v167 = vmul.f32 %v55, %v138
  %v168 = vmul.f32 %v56, %v143
  %v169 = vmul.f32 %v57, %v148
  %v170 = vmul.f32 %v58, %v153
  %171 = vset.pattern.permute.xlu0 1
  %172 = vperm.xlu0 %171, %v59
  %v173 = vpop.permute.xlu0 %172
  %175 = vset.pattern.permute.xlu0 1
  %176 = vperm.xlu0 %175, %v60
  %v177 = vpop.permute.xlu0 %176
  %179 = vset.pattern.permute.xlu0 1
  %180 = vperm.xlu0 %179, %v61
  %v181 = vpop.permute.xlu0 %180
  %183 = vset.pattern.permute.xlu0 1
  %184 = vperm.xlu0 %183, %v62
  %v185 = vpop.permute.xlu0 %184
  %187 = vset.pattern.permute.xlu0 1
  %188 = vperm.xlu0 %187, %v63
  %v189 = vpop.permute.xlu0 %188
  %191 = vset.pattern.permute.xlu0 1
  %192 = vperm.xlu0 %191, %v64
  %v193 = vpop.permute.xlu0 %192
  %195 = vset.pattern.permute.xlu0 1
  %196 = vperm.xlu0 %195, %v65
  %v197 = vpop.permute.xlu0 %196
  %199 = vset.pattern.permute.xlu0 1
  %200 = vperm.xlu0 %199, %v66
  %v201 = vpop.permute.xlu0 %200
  %203 = vset.pattern.permute.xlu0 1
  %204 = vperm.xlu0 %203, %v67
  %v205 = vpop.permute.xlu0 %204
  %207 = vset.pattern.permute.xlu0 1
  %208 = vperm.xlu0 %207, %v68
  %v209 = vpop.permute.xlu0 %208
  %211 = vset.pattern.permute.xlu0 1
  %212 = vperm.xlu0 %211, %v69
  %v213 = vpop.permute.xlu0 %212
  %215 = vset.pattern.permute.xlu0 1
  %216 = vperm.xlu0 %215, %v70
  %v217 = vpop.permute.xlu0 %216
  %219 = vset.pattern.permute.xlu0 1
  %220 = vperm.xlu0 %219, %v71
  %v221 = vpop.permute.xlu0 %220
  %223 = vset.pattern.permute.xlu0 1
  %224 = vperm.xlu0 %223, %v72
  %v225 = vpop.permute.xlu0 %224
  %227 = vset.pattern.permute.xlu0 1
  %228 = vperm.xlu0 %227, %v73
  %v229 = vpop.permute.xlu0 %228
  %231 = vset.pattern.permute.xlu0 1
  %232 = vperm.xlu0 %231, %v74
  %v233 = vpop.permute.xlu0 %232
  %v235 = vmul.f32 %v43, %v173
  %v236 = vmul.f32 %v44, %v177
  %v237 = vmul.f32 %v45, %v181
  %v238 = vmul.f32 %v46, %v185
  %v239 = vmul.f32 %v47, %v189
  %v240 = vmul.f32 %v48, %v193
  %v241 = vmul.f32 %v49, %v197
  %v242 = vmul.f32 %v50, %v201
  %v243 = vmul.f32 %v51, %v205
  %v244 = vmul.f32 %v52, %v209
  %v245 = vmul.f32 %v53, %v213
  %v246 = vmul.f32 %v54, %v217
  %v247 = vmul.f32 %v55, %v221
  %v248 = vmul.f32 %v56, %v225
  %v249 = vmul.f32 %v57, %v229
  %v250 = vmul.f32 %v58, %v233
  %267 = vrot.lane.b32.xlu0 %v155, 16
  %v268 = vpop.permute.xlu0 %267
  %269 = vrot.lane.b32.xlu0 %v156, 16
  %v270 = vpop.permute.xlu0 %269
  %271 = vrot.lane.b32.xlu0 %v157, 16
  %v272 = vpop.permute.xlu0 %271
  %273 = vrot.lane.b32.xlu0 %v158, 16
  %v274 = vpop.permute.xlu0 %273
  %275 = vrot.lane.b32.xlu0 %v159, 16
  %v276 = vpop.permute.xlu0 %275
  %277 = vrot.lane.b32.xlu0 %v160, 16
  %v278 = vpop.permute.xlu0 %277
  %279 = vrot.lane.b32.xlu0 %v161, 16
  %v280 = vpop.permute.xlu0 %279
  %281 = vrot.lane.b32.xlu0 %v162, 16
  %v282 = vpop.permute.xlu0 %281
  %283 = vrot.lane.b32.xlu0 %v163, 16
  %v284 = vpop.permute.xlu0 %283
  %285 = vrot.lane.b32.xlu0 %v164, 16
  %v286 = vpop.permute.xlu0 %285
  %287 = vrot.lane.b32.xlu0 %v165, 16
  %v288 = vpop.permute.xlu0 %287
  %289 = vrot.lane.b32.xlu0 %v166, 16
  %v290 = vpop.permute.xlu0 %289
  %291 = vrot.lane.b32.xlu0 %v167, 16
  %v292 = vpop.permute.xlu0 %291
  %293 = vrot.lane.b32.xlu0 %v168, 16
  %v294 = vpop.permute.xlu0 %293
  %295 = vrot.lane.b32.xlu0 %v169, 16
  %v296 = vpop.permute.xlu0 %295
  %297 = vrot.lane.b32.xlu0 %v170, 16
  %v298 = vpop.permute.xlu0 %297
  %331 = vrot.lane.b32.xlu0 %v235, 48
  %v332 = vpop.permute.xlu0 %331
  %333 = vrot.lane.b32.xlu0 %v236, 48
  %v334 = vpop.permute.xlu0 %333
  %335 = vrot.lane.b32.xlu0 %v237, 48
  %v336 = vpop.permute.xlu0 %335
  %337 = vrot.lane.b32.xlu0 %v238, 48
  %v338 = vpop.permute.xlu0 %337
  %339 = vrot.lane.b32.xlu0 %v239, 48
  %v340 = vpop.permute.xlu0 %339
  %341 = vrot.lane.b32.xlu0 %v240, 48
  %v342 = vpop.permute.xlu0 %341
  %343 = vrot.lane.b32.xlu0 %v241, 48
  %v344 = vpop.permute.xlu0 %343
  %345 = vrot.lane.b32.xlu0 %v242, 48
  %v346 = vpop.permute.xlu0 %345
  %347 = vrot.lane.b32.xlu0 %v243, 48
  %v348 = vpop.permute.xlu0 %347
  %349 = vrot.lane.b32.xlu0 %v244, 48
  %v350 = vpop.permute.xlu0 %349
  %351 = vrot.lane.b32.xlu0 %v245, 48
  %v352 = vpop.permute.xlu0 %351
  %353 = vrot.lane.b32.xlu0 %v246, 48
  %v354 = vpop.permute.xlu0 %353
  %355 = vrot.lane.b32.xlu0 %v247, 48
  %v356 = vpop.permute.xlu0 %355
  %357 = vrot.lane.b32.xlu0 %v248, 48
  %v358 = vpop.permute.xlu0 %357
  %359 = vrot.lane.b32.xlu0 %v249, 48
  %v360 = vpop.permute.xlu0 %359
  %361 = vrot.lane.b32.xlu0 %v250, 48
  %v362 = vpop.permute.xlu0 %361
  %vm379 = vcmask 130048
  %v380 = vsel %vm379, %v27, %v268
  %v381 = vsel %vm379, %v28, %v270
  %v382 = vsel %vm379, %v29, %v272
  %v383 = vsel %vm379, %v30, %v274
  %v384 = vsel %vm379, %v31, %v276
  %v385 = vsel %vm379, %v32, %v278
  %v386 = vsel %vm379, %v33, %v280
  %v387 = vsel %vm379, %v34, %v282
  %v388 = vsel %vm379, %v35, %v284
  %v389 = vsel %vm379, %v36, %v286
  %v390 = vsel %vm379, %v37, %v288
  %v391 = vsel %vm379, %v38, %v290
  %v392 = vsel %vm379, %v39, %v292
  %v393 = vsel %vm379, %v40, %v294
  %v394 = vsel %vm379, %v41, %v296
  %v395 = vsel %vm379, %v42, %v298
  %vm396 = vcmask 392192
  %v397 = vsel %vm396, %v380, %v332
  %v398 = vsel %vm396, %v381, %v334
  %v399 = vsel %vm396, %v382, %v336
  %v400 = vsel %vm396, %v383, %v338
  %v401 = vsel %vm396, %v384, %v340
  %v402 = vsel %vm396, %v385, %v342
  %v403 = vsel %vm396, %v386, %v344
  %v404 = vsel %vm396, %v387, %v346
  %v405 = vsel %vm396, %v388, %v348
  %v406 = vsel %vm396, %v389, %v350
  %v407 = vsel %vm396, %v390, %v352
  %v408 = vsel %vm396, %v391, %v354
  %v409 = vsel %vm396, %v392, %v356
  %v410 = vsel %vm396, %v393, %v358
  %v411 = vsel %vm396, %v394, %v360
  %v412 = vsel %vm396, %v395, %v362
  %v413 = vpack.c.bf16 %v398, %v397
  %v414 = vpack.c.bf16 %v400, %v399
  %v415 = vpack.c.bf16 %v402, %v401
  %v416 = vpack.c.bf16 %v404, %v403
  %v417 = vpack.c.bf16 %v406, %v405
  %v418 = vpack.c.bf16 %v408, %v407
  %v419 = vpack.c.bf16 %v410, %v409
  %v420 = vpack.c.bf16 %v412, %v411
  %v421 = vld [vmem:[%s3] sm:$0xff]
  %v422 = vld [vmem:[%s3 + $0x8] sm:$0xff]
  %v423 = vld [vmem:[%s3 + $0x10] sm:$0xff]
  %v424 = vld [vmem:[%s3 + $0x18] sm:$0xff]
  %v425 = vld [vmem:[%s3 + $0x20] sm:$0xff]
  %v426 = vld [vmem:[%s3 + $0x28] sm:$0xff]
  %v427 = vld [vmem:[%s3 + $0x30] sm:$0xff]
  %v428 = vld [vmem:[%s3 + $0x38] sm:$0xff]
  %v429 = vld [vmem:[%s3 + $0x40] sm:$0xff]
  %v430 = vld [vmem:[%s3 + $0x48] sm:$0xff]
  %v431 = vld [vmem:[%s4] sm:$0x3]
  %v433 = vlaneseq
  %v434 = vshrl.u32 %v433, 7
  %v435 = vsub.s32 0, %v434
  %v436 = vrot.slane %v431, %v435
  %v437 = vlaneseq
  %v438 = vshrl.u32 %v437, 7
  %v439 = vsub.s32 1, %v438
  %v440 = vrot.slane %v431, %v439
  %v453 = vunpack.c.l.b16 %v421
  %v454 = vunpack.c.h.b16 %v421
  %v455 = vunpack.c.l.b16 %v422
  %v456 = vunpack.c.h.b16 %v422
  %v457 = vunpack.c.l.b16 %v423
  %v458 = vunpack.c.h.b16 %v423
  %v459 = vunpack.c.l.b16 %v424
  %v460 = vunpack.c.h.b16 %v424
  %v461 = vunpack.c.l.b16 %v425
  %v462 = vunpack.c.h.b16 %v425
  %v463 = vunpack.c.l.b16 %v426
  %v464 = vunpack.c.h.b16 %v426
  %v465 = vunpack.c.l.b16 %v427
  %v466 = vunpack.c.h.b16 %v427
  %v467 = vunpack.c.l.b16 %v428
  %v468 = vunpack.c.h.b16 %v428
  %v469 = vunpack.c.l.b16 %v429
  %v470 = vunpack.c.h.b16 %v429
  %v471 = vunpack.c.l.b16 %v430
  %v472 = vunpack.c.h.b16 %v430
  %v473 = vpack.c.b16 %v455, %v453
  %v474 = vpack.c.b16 %v456, %v454
  %v475 = vpack.c.b16 %v459, %v457
  %v476 = vpack.c.b16 %v460, %v458
  %v477 = vpack.c.b16 %v463, %v461
  %v478 = vpack.c.b16 %v464, %v462
  %v479 = vpack.c.b16 %v467, %v465
  %v480 = vpack.c.b16 %v468, %v466
  %v481 = vpack.c.b16 %v471, %v469
  %v482 = vpack.c.b16 %v472, %v470
  %vm493 = vcmask 654336
  %v495 = vsel %vm493, %v413, 0
  %v498 = vsel %vm493, %v414, 0
  %v501 = vsel %vm493, %v415, 0
  %v504 = vsel %vm493, %v416, 0
  %v507 = vsel %vm493, %v417, 0
  %v510 = vsel %vm493, %v418, 0
  %v513 = vsel %vm493, %v419, 0
  %v516 = vsel %vm493, %v420, 0
  %518 = vmatprep.subr.bf16.mxu0 %v474
  %519 = vmatpush1.bf16.msra.mxu0 %v473
  %520 = vmatprep.subr.bf16.mxu0 %v476
  %521 = vmatpush1.bf16.msra.mxu0 %v475
  %522 = vmatprep.subr.bf16.mxu0 %v478
  %523 = vmatpush1.bf16.msra.mxu0 %v477
  %524 = vmatprep.subr.bf16.mxu0 %v480
  %525 = vmatpush1.bf16.msra.mxu0 %v479
  %526 = vmatprep.subr.bf16.mxu0 %v482
  %527 = vmatpush1.bf16.msra.mxu0 %v481
  %528 = vmatprep.subr.bf16.mxu0 0
  %529 = vmatpush1.bf16.msra.mxu0 0
  %530 = vmatprep.subr.bf16.mxu0 0
  %531 = vmatpush1.bf16.msra.mxu0 0
  %532 = vmatprep.subr.bf16.mxu0 0
  %533 = vmatpush1.bf16.msra.mxu0 0
  %534 = vmatprep.subr.bf16.mxu0 0
  %535 = vmatpush1.bf16.msra.mxu0 0
  %536 = vmatprep.subr.bf16.mxu0 0
  %537 = vmatpush1.bf16.msra.mxu0 0
  %538 = vmatprep.subr.bf16.mxu0 0
  %539 = vmatpush1.bf16.msra.mxu0 0
  %540 = vmatprep.subr.bf16.mxu0 0
  %541 = vmatpush1.bf16.msra.mxu0 0
  %542 = vmatprep.subr.bf16.mxu0 0
  %543 = vmatpush1.bf16.msra.mxu0 0
  %544 = vmatprep.subr.bf16.mxu0 0
  %545 = vmatpush1.bf16.msra.mxu0 0
  %546 = vmatprep.subr.bf16.mxu0 0
  %547 = vmatpush1.bf16.msra.mxu0 0
  %548 = vmatprep.subr.bf16.mxu0 0
  %549 = vmatpush1.bf16.msra.mxu0 0
  %550 = vmatprep.mubr.bf16.mxu0 0
  %551 = vmatmul.mubr.bf16.gmra.mrb[0].mxu0 %v495
  %v552 = vpop.f32.mrb[0].mxu0
  %v553 = vadd.f32 %v436, %v552
  %v554 = vpop.f32.mrb[0].mxu0
  %v555 = vadd.f32 %v440, %v554
  %v556 = vpop.f32.mrb[0].mxu0
  %v557 = vadd.f32 %v436, %v556
  %v558 = vpop.f32.mrb[0].mxu0
  %v559 = vadd.f32 %v440, %v558
  %560 = vmatprep.mubr.bf16.mxu0 0
  %561 = vmatmul.mubr.bf16.gmra.mrb[0].mxu0 %v498
  %v562 = vpop.f32.mrb[0].mxu0
  %v563 = vadd.f32 %v436, %v562
  %v564 = vpop.f32.mrb[0].mxu0
  %v565 = vadd.f32 %v440, %v564
  %v566 = vpop.f32.mrb[0].mxu0
  %v567 = vadd.f32 %v436, %v566
  %v568 = vpop.f32.mrb[0].mxu0
  %v569 = vadd.f32 %v440, %v568
  %570 = vmatprep.mubr.bf16.mxu0 0
  %571 = vmatmul.mubr.bf16.gmra.mrb[0].mxu0 %v501
  %v572 = vpop.f32.mrb[0].mxu0
  %v573 = vadd.f32 %v436, %v572
  %v574 = vpop.f32.mrb[0].mxu0
  %v575 = vadd.f32 %v440, %v574
  %v576 = vpop.f32.mrb[0].mxu0
  %v577 = vadd.f32 %v436, %v576
  %v578 = vpop.f32.mrb[0].mxu0
  %v579 = vadd.f32 %v440, %v578
  %580 = vmatprep.mubr.bf16.mxu0 0
  %581 = vmatmul.mubr.bf16.gmra.mrb[0].mxu0 %v504
  %v582 = vpop.f32.mrb[0].mxu0
  %v583 = vadd.f32 %v436, %v582
  %v584 = vpop.f32.mrb[0].mxu0
  %v585 = vadd.f32 %v440, %v584
  %v586 = vpop.f32.mrb[0].mxu0
  %v587 = vadd.f32 %v436, %v586
  %v588 = vpop.f32.mrb[0].mxu0
  %v589 = vadd.f32 %v440, %v588
  %590 = vmatprep.mubr.bf16.mxu0 0
  %591 = vmatmul.mubr.bf16.gmra.mrb[0].mxu0 %v507
  %v592 = vpop.f32.mrb[0].mxu0
  %v593 = vadd.f32 %v436, %v592
  %v594 = vpop.f32.mrb[0].mxu0
  %v595 = vadd.f32 %v440, %v594
  %v596 = vpop.f32.mrb[0].mxu0
  %v597 = vadd.f32 %v436, %v596
  %v598 = vpop.f32.mrb[0].mxu0
  %v599 = vadd.f32 %v440, %v598
  %600 = vmatprep.mubr.bf16.mxu0 0
  %601 = vmatmul.mubr.bf16.gmra.mrb[0].mxu0 %v510
  %v602 = vpop.f32.mrb[0].mxu0
  %v603 = vadd.f32 %v436, %v602
  %v604 = vpop.f32.mrb[0].mxu0
  %v605 = vadd.f32 %v440, %v604
  %v606 = vpop.f32.mrb[0].mxu0
  %v607 = vadd.f32 %v436, %v606
  %v608 = vpop.f32.mrb[0].mxu0
  %v609 = vadd.f32 %v440, %v608
  %610 = vmatprep.mubr.bf16.mxu0 0
  %611 = vmatmul.mubr.bf16.gmra.mrb[0].mxu0 %v513
  %v612 = vpop.f32.mrb[0].mxu0
  %v613 = vadd.f32 %v436, %v612
  %v614 = vpop.f32.mrb[0].mxu0
  %v615 = vadd.f32 %v440, %v614
  %v616 = vpop.f32.mrb[0].mxu0
  %v617 = vadd.f32 %v436, %v616
  %v618 = vpop.f32.mrb[0].mxu0
  %v619 = vadd.f32 %v440, %v618
  %620 = vmatprep.mubr.bf16.mxu0 0
  %621 = vmatmul.mubr.bf16.gmra.mrb[0].mxu0 %v516
  %v622 = vpop.f32.mrb[0].mxu0
  %v623 = vadd.f32 %v436, %v622
  %v624 = vpop.f32.mrb[0].mxu0
  %v625 = vadd.f32 %v440, %v624
  %v626 = vpop.f32.mrb[0].mxu0
  %v627 = vadd.f32 %v436, %v626
  %v628 = vpop.f32.mrb[0].mxu0
  %v629 = vadd.f32 %v440, %v628
  %630 = vdwg.mxu0
  %vm631 = vcmp.gt.f32.partialorder %v553, 0.0
  %vm632 = vcmp.gt.f32.partialorder %v555, 0.0
  %vm633 = vcmp.gt.f32.partialorder %v557, 0.0
  %vm634 = vcmp.gt.f32.partialorder %v559, 0.0
  %vm635 = vcmp.gt.f32.partialorder %v563, 0.0
  %vm636 = vcmp.gt.f32.partialorder %v565, 0.0
  %vm637 = vcmp.gt.f32.partialorder %v567, 0.0
  %vm638 = vcmp.gt.f32.partialorder %v569, 0.0
  %vm639 = vcmp.gt.f32.partialorder %v573, 0.0
  %vm640 = vcmp.gt.f32.partialorder %v575, 0.0
  %vm641 = vcmp.gt.f32.partialorder %v577, 0.0
  %vm642 = vcmp.gt.f32.partialorder %v579, 0.0
  %vm643 = vcmp.gt.f32.partialorder %v583, 0.0
  %vm644 = vcmp.gt.f32.partialorder %v585, 0.0
  %vm645 = vcmp.gt.f32.partialorder %v587, 0.0
  %vm646 = vcmp.gt.f32.partialorder %v589, 0.0
  %vm647 = vcmp.gt.f32.partialorder %v593, 0.0
  %vm648 = vcmp.gt.f32.partialorder %v595, 0.0
  %vm649 = vcmp.gt.f32.partialorder %v597, 0.0
  %vm650 = vcmp.gt.f32.partialorder %v599, 0.0
  %vm651 = vcmp.gt.f32.partialorder %v603, 0.0
  %vm652 = vcmp.gt.f32.partialorder %v605, 0.0
  %vm653 = vcmp.gt.f32.partialorder %v607, 0.0
  %vm654 = vcmp.gt.f32.partialorder %v609, 0.0
  %vm655 = vcmp.gt.f32.partialorder %v613, 0.0
  %vm656 = vcmp.gt.f32.partialorder %v615, 0.0
  %vm657 = vcmp.gt.f32.partialorder %v617, 0.0
  %vm658 = vcmp.gt.f32.partialorder %v619, 0.0
  %vm659 = vcmp.gt.f32.partialorder %v623, 0.0
  %vm660 = vcmp.gt.f32.partialorder %v625, 0.0
  %vm661 = vcmp.gt.f32.partialorder %v627, 0.0
  %vm662 = vcmp.gt.f32.partialorder %v629, 0.0
  %v663 = vmul.f32 %v553, 0.01
  %v664 = vmul.f32 %v555, 0.01
  %v665 = vmul.f32 %v557, 0.01
  %v666 = vmul.f32 %v559, 0.01
  %v667 = vmul.f32 %v563, 0.01
  %v668 = vmul.f32 %v565, 0.01
  %v669 = vmul.f32 %v567, 0.01
  %v670 = vmul.f32 %v569, 0.01
  %v671 = vmul.f32 %v573, 0.01
  %v672 = vmul.f32 %v575, 0.01
  %v673 = vmul.f32 %v577, 0.01
  %v674 = vmul.f32 %v579, 0.01
  %v675 = vmul.f32 %v583, 0.01
  %v676 = vmul.f32 %v585, 0.01
  %v677 = vmul.f32 %v587, 0.01
  %v678 = vmul.f32 %v589, 0.01
  %v679 = vmul.f32 %v593, 0.01
  %v680 = vmul.f32 %v595, 0.01
  %v681 = vmul.f32 %v597, 0.01
  %v682 = vmul.f32 %v599, 0.01
  %v683 = vmul.f32 %v603, 0.01
  %v684 = vmul.f32 %v605, 0.01
  %v685 = vmul.f32 %v607, 0.01
  %v686 = vmul.f32 %v609, 0.01
  %v687 = vmul.f32 %v613, 0.01
  %v688 = vmul.f32 %v615, 0.01
  %v689 = vmul.f32 %v617, 0.01
  %v690 = vmul.f32 %v619, 0.01
  %v691 = vmul.f32 %v623, 0.01
  %v692 = vmul.f32 %v625, 0.01
  %v693 = vmul.f32 %v627, 0.01
  %v694 = vmul.f32 %v629, 0.01
  %v695 = vsel %vm631, %v553, %v663
  %v696 = vsel %vm632, %v555, %v664
  %v697 = vsel %vm633, %v557, %v665
  %v698 = vsel %vm634, %v559, %v666
  %v699 = vsel %vm635, %v563, %v667
  %v700 = vsel %vm636, %v565, %v668
  %v701 = vsel %vm637, %v567, %v669
  %v702 = vsel %vm638, %v569, %v670
  %v703 = vsel %vm639, %v573, %v671
  %v704 = vsel %vm640, %v575, %v672
  %v705 = vsel %vm641, %v577, %v673
  %v706 = vsel %vm642, %v579, %v674
  %v707 = vsel %vm643, %v583, %v675
  %v708 = vsel %vm644, %v585, %v676
  %v709 = vsel %vm645, %v587, %v677
  %v710 = vsel %vm646, %v589, %v678
  %v711 = vsel %vm647, %v593, %v679
  %v712 = vsel %vm648, %v595, %v680
  %v713 = vsel %vm649, %v597, %v681
  %v714 = vsel %vm650, %v599, %v682
  %v715 = vsel %vm651, %v603, %v683
  %v716 = vsel %vm652, %v605, %v684
  %v717 = vsel %vm653, %v607, %v685
  %v718 = vsel %vm654, %v609, %v686
  %v719 = vsel %vm655, %v613, %v687
  %v720 = vsel %vm656, %v615, %v688
  %v721 = vsel %vm657, %v617, %v689
  %v722 = vsel %vm658, %v619, %v690
  %v723 = vsel %vm659, %v623, %v691
  %v724 = vsel %vm660, %v625, %v692
  %v725 = vsel %vm661, %v627, %v693
  %v726 = vsel %vm662, %v629, %v694
  %v727 = vpack.c.bf16 %v697, %v695
  %v728 = vpack.c.bf16 %v698, %v696
  %v729 = vpack.c.bf16 %v701, %v699
  %v730 = vpack.c.bf16 %v702, %v700
  %v731 = vpack.c.bf16 %v705, %v703
  %v732 = vpack.c.bf16 %v706, %v704
  %v733 = vpack.c.bf16 %v709, %v707
  %v734 = vpack.c.bf16 %v710, %v708
  %v735 = vpack.c.bf16 %v713, %v711
  %v736 = vpack.c.bf16 %v714, %v712
  %v737 = vpack.c.bf16 %v717, %v715
  %v738 = vpack.c.bf16 %v718, %v716
  %v739 = vpack.c.bf16 %v721, %v719
  %v740 = vpack.c.bf16 %v722, %v720
  %v741 = vpack.c.bf16 %v725, %v723
  %v742 = vpack.c.bf16 %v726, %v724
  %v743 = vld [vmem:[%s5] sm:$0xf]
  %v744 = vld [vmem:[%s5 + $0x4] sm:$0xf]
  %v745 = vld [vmem:[%s5 + $0x8] sm:$0xf]
  %v746 = vld [vmem:[%s5 + $0xc] sm:$0xf]
  %v747 = vld [vmem:[%s5 + $0x10] sm:$0xf]
  %v748 = vld [vmem:[%s5 + $0x14] sm:$0xf]
  %v749 = vld [vmem:[%s5 + $0x18] sm:$0xf]
  %v750 = vld [vmem:[%s5 + $0x1c] sm:$0xf]
  %v751 = vld [vmem:[%s5 + $0x20] sm:$0xf]
  %v752 = vld [vmem:[%s5 + $0x24] sm:$0xf]
  %v753 = vld [vmem:[%s5 + $0x28] sm:$0xf]
  %v754 = vld [vmem:[%s5 + $0x2c] sm:$0xf]
  %v755 = vld [vmem:[%s5 + $0x30] sm:$0xf]
  %v756 = vld [vmem:[%s5 + $0x34] sm:$0xf]
  %v757 = vld [vmem:[%s5 + $0x38] sm:$0xf]
  %v758 = vld [vmem:[%s5 + $0x3c] sm:$0xf]
  %v759 = vld [vmem:[%s5 + $0x40] sm:$0xf]
  %v760 = vld [vmem:[%s5 + $0x44] sm:$0xf]
  %v761 = vld [vmem:[%s6] sm:$0x1]
  %v763 = vlaneseq
  %v764 = vshrl.u32 %v763, 7
  %v765 = vsub.s32 0, %v764
  %v766 = vrot.slane %v761, %v765
  %v786 = vunpack.c.l.b16 %v743
  %v787 = vunpack.c.l.b16 %v744
  %v788 = vunpack.c.l.b16 %v745
  %v789 = vunpack.c.l.b16 %v746
  %v790 = vunpack.c.l.b16 %v747
  %v791 = vunpack.c.l.b16 %v748
  %v792 = vunpack.c.l.b16 %v749
  %v793 = vunpack.c.l.b16 %v750
  %v794 = vunpack.c.l.b16 %v751
  %v795 = vunpack.c.l.b16 %v752
  %v796 = vunpack.c.l.b16 %v753
  %v797 = vunpack.c.l.b16 %v754
  %v798 = vunpack.c.l.b16 %v755
  %v799 = vunpack.c.l.b16 %v756
  %v800 = vunpack.c.l.b16 %v757
  %v801 = vunpack.c.l.b16 %v758
  %v802 = vunpack.c.l.b16 %v759
  %v803 = vunpack.c.l.b16 %v760
  %v804 = vpack.c.b16 %v787, %v786
  %v805 = vpack.c.b16 %v789, %v788
  %v806 = vpack.c.b16 %v791, %v790
  %v807 = vpack.c.b16 %v793, %v792
  %v808 = vpack.c.b16 %v795, %v794
  %v809 = vpack.c.b16 %v797, %v796
  %v810 = vpack.c.b16 %v799, %v798
  %v811 = vpack.c.b16 %v801, %v800
  %v812 = vpack.c.b16 %v803, %v802
  %v823 = vsel %vm379, %v728, 0
  %v826 = vsel %vm379, %v730, 0
  %v829 = vsel %vm379, %v732, 0
  %v832 = vsel %vm379, %v734, 0
  %v835 = vsel %vm379, %v736, 0
  %v838 = vsel %vm379, %v738, 0
  %v841 = vsel %vm379, %v740, 0
  %v844 = vsel %vm379, %v742, 0
  %846 = vmatprep.subr.bf16.mxu0 0
  %847 = vmatpush1.bf16.msra.mxu0 %v804
  %848 = vmatprep.subr.bf16.mxu0 0
  %849 = vmatpush1.bf16.msra.mxu0 %v805
  %850 = vmatprep.subr.bf16.mxu0 0
  %851 = vmatpush1.bf16.msra.mxu0 %v806
  %852 = vmatprep.subr.bf16.mxu0 0
  %853 = vmatpush1.bf16.msra.mxu0 %v807
  %854 = vmatprep.subr.bf16.mxu0 0
  %855 = vmatpush1.bf16.msra.mxu0 %v808
  %856 = vmatprep.subr.bf16.mxu0 0
  %857 = vmatpush1.bf16.msra.mxu0 %v809
  %858 = vmatprep.subr.bf16.mxu0 0
  %859 = vmatpush1.bf16.msra.mxu0 %v810
  %860 = vmatprep.subr.bf16.mxu0 0
  %861 = vmatpush1.bf16.msra.mxu0 %v811
  %862 = vmatprep.subr.bf16.mxu0 0
  %863 = vmatpush1.bf16.msra.mxu0 %v812
  %864 = vmatprep.subr.bf16.mxu0 0
  %865 = vmatpush1.bf16.msra.mxu0 0
  %866 = vmatprep.subr.bf16.mxu0 0
  %867 = vmatpush1.bf16.msra.mxu0 0
  %868 = vmatprep.subr.bf16.mxu0 0
  %869 = vmatpush1.bf16.msra.mxu0 0
  %870 = vmatprep.subr.bf16.mxu0 0
  %871 = vmatpush1.bf16.msra.mxu0 0
  %872 = vmatprep.subr.bf16.mxu0 0
  %873 = vmatpush1.bf16.msra.mxu0 0
  %874 = vmatprep.subr.bf16.mxu0 0
  %875 = vmatpush1.bf16.msra.mxu0 0
  %876 = vmatprep.subr.bf16.mxu0 0
  %877 = vmatpush1.bf16.msra.mxu0 0
  %878 = vmatprep.mubr.bf16.mxu0 %v823
  %879 = vmatmul.mubr.bf16.gmra.mrb[0].mxu0 %v727
  %v880 = vpop.f32.mrb[0].mxu0
  %v881 = vadd.f32 %v766, %v880
  %v882 = vpop.f32.mrb[0].mxu0
  %v883 = vpop.f32.mrb[0].mxu0
  %v884 = vadd.f32 %v766, %v883
  %v885 = vpop.f32.mrb[0].mxu0
  %886 = vmatprep.mubr.bf16.mxu0 %v826
  %887 = vmatmul.mubr.bf16.gmra.mrb[0].mxu0 %v729
  %v888 = vpop.f32.mrb[0].mxu0
  %v889 = vadd.f32 %v766, %v888
  %v890 = vpop.f32.mrb[0].mxu0
  %v891 = vpop.f32.mrb[0].mxu0
  %v892 = vadd.f32 %v766, %v891
  %v893 = vpop.f32.mrb[0].mxu0
  %894 = vmatprep.mubr.bf16.mxu0 %v829
  %895 = vmatmul.mubr.bf16.gmra.mrb[0].mxu0 %v731
  %v896 = vpop.f32.mrb[0].mxu0
  %v897 = vadd.f32 %v766, %v896
  %v898 = vpop.f32.mrb[0].mxu0
  %v899 = vpop.f32.mrb[0].mxu0
  %v900 = vadd.f32 %v766, %v899
  %v901 = vpop.f32.mrb[0].mxu0
  %902 = vmatprep.mubr.bf16.mxu0 %v832
  %903 = vmatmul.mubr.bf16.gmra.mrb[0].mxu0 %v733
  %v904 = vpop.f32.mrb[0].mxu0
  %v905 = vadd.f32 %v766, %v904
  %v906 = vpop.f32.mrb[0].mxu0
  %v907 = vpop.f32.mrb[0].mxu0
  %v908 = vadd.f32 %v766, %v907
  %v909 = vpop.f32.mrb[0].mxu0
  %910 = vmatprep.mubr.bf16.mxu0 %v835
  %911 = vmatmul.mubr.bf16.gmra.mrb[0].mxu0 %v735
  %v912 = vpop.f32.mrb[0].mxu0
  %v913 = vadd.f32 %v766, %v912
  %v914 = vpop.f32.mrb[0].mxu0
  %v915 = vpop.f32.mrb[0].mxu0
  %v916 = vadd.f32 %v766, %v915
  %v917 = vpop.f32.mrb[0].mxu0
  %918 = vmatprep.mubr.bf16.mxu0 %v838
  %919 = vmatmul.mubr.bf16.gmra.mrb[0].mxu0 %v737
  %v920 = vpop.f32.mrb[0].mxu0
  %v921 = vadd.f32 %v766, %v920
  %v922 = vpop.f32.mrb[0].mxu0
  %v923 = vpop.f32.mrb[0].mxu0
  %v924 = vadd.f32 %v766, %v923
  %v925 = vpop.f32.mrb[0].mxu0
  %926 = vmatprep.mubr.bf16.mxu0 %v841
  %927 = vmatmul.mubr.bf16.gmra.mrb[0].mxu0 %v739
  %v928 = vpop.f32.mrb[0].mxu0
  %v929 = vadd.f32 %v766, %v928
  %v930 = vpop.f32.mrb[0].mxu0
  %v931 = vpop.f32.mrb[0].mxu0
  %v932 = vadd.f32 %v766, %v931
  %v933 = vpop.f32.mrb[0].mxu0
  %934 = vmatprep.mubr.bf16.mxu0 %v844
  %935 = vmatmul.mubr.bf16.gmra.mrb[0].mxu0 %v741
  %v936 = vpop.f32.mrb[0].mxu0
  %v937 = vadd.f32 %v766, %v936
  %v938 = vpop.f32.mrb[0].mxu0
  %v939 = vpop.f32.mrb[0].mxu0
  %v940 = vadd.f32 %v766, %v939
  %v941 = vpop.f32.mrb[0].mxu0
  %942 = vdwg.mxu0
  %v943 = vmul.f32 %v881, %v59
  %v944 = vmul.f32 %v884, %v60
  %v945 = vmul.f32 %v889, %v61
  %v946 = vmul.f32 %v892, %v62
  %v947 = vmul.f32 %v897, %v63
  %v948 = vmul.f32 %v900, %v64
  %v949 = vmul.f32 %v905, %v65
  %v950 = vmul.f32 %v908, %v66
  %v951 = vmul.f32 %v913, %v67
  %v952 = vmul.f32 %v916, %v68
  %v953 = vmul.f32 %v921, %v69
  %v954 = vmul.f32 %v924, %v70
  %v955 = vmul.f32 %v929, %v71
  %v956 = vmul.f32 %v932, %v72
  %v957 = vmul.f32 %v937, %v73
  %v958 = vmul.f32 %v940, %v74
  %975 = vrot.lane.b32.xlu0 %v943, 127
  %v976 = vpop.permute.xlu0 %975
  %977 = vrot.lane.b32.xlu0 %v944, 127
  %v978 = vpop.permute.xlu0 %977
  %979 = vrot.lane.b32.xlu0 %v945, 127
  %v980 = vpop.permute.xlu0 %979
  %981 = vrot.lane.b32.xlu0 %v946, 127
  %v982 = vpop.permute.xlu0 %981
  %983 = vrot.lane.b32.xlu0 %v947, 127
  %v984 = vpop.permute.xlu0 %983
  %985 = vrot.lane.b32.xlu0 %v948, 127
  %v986 = vpop.permute.xlu0 %985
  %987 = vrot.lane.b32.xlu0 %v949, 127
  %v988 = vpop.permute.xlu0 %987
  %989 = vrot.lane.b32.xlu0 %v950, 127
  %v990 = vpop.permute.xlu0 %989
  %991 = vrot.lane.b32.xlu0 %v951, 127
  %v992 = vpop.permute.xlu0 %991
  %993 = vrot.lane.b32.xlu0 %v952, 127
  %v994 = vpop.permute.xlu0 %993
  %995 = vrot.lane.b32.xlu0 %v953, 127
  %v996 = vpop.permute.xlu0 %995
  %997 = vrot.lane.b32.xlu0 %v954, 127
  %v998 = vpop.permute.xlu0 %997
  %999 = vrot.lane.b32.xlu0 %v955, 127
  %v1000 = vpop.permute.xlu0 %999
  %1001 = vrot.lane.b32.xlu0 %v956, 127
  %v1002 = vpop.permute.xlu0 %1001
  %1003 = vrot.lane.b32.xlu0 %v957, 127
  %v1004 = vpop.permute.xlu0 %1003
  %1005 = vrot.lane.b32.xlu0 %v958, 127
  %v1006 = vpop.permute.xlu0 %1005
  %v1023 = vadd.f32 %v943, %v976
  %v1024 = vadd.f32 %v944, %v978
  %v1025 = vadd.f32 %v945, %v980
  %v1026 = vadd.f32 %v946, %v982
  %v1027 = vadd.f32 %v947, %v984
  %v1028 = vadd.f32 %v948, %v986
  %v1029 = vadd.f32 %v949, %v988
  %v1030 = vadd.f32 %v950, %v990
  %v1031 = vadd.f32 %v951, %v992
  %v1032 = vadd.f32 %v952, %v994
  %v1033 = vadd.f32 %v953, %v996
  %v1034 = vadd.f32 %v954, %v998
  %v1035 = vadd.f32 %v955, %v1000
  %v1036 = vadd.f32 %v956, %v1002
  %v1037 = vadd.f32 %v957, %v1004
  %v1038 = vadd.f32 %v958, %v1006
  %1039 = vrot.lane.b32.xlu0 %v59, 1
  %v1040 = vpop.permute.xlu0 %1039
  %1041 = vrot.lane.b32.xlu0 %v60, 1
  %v1042 = vpop.permute.xlu0 %1041
  %1043 = vrot.lane.b32.xlu0 %v61, 1
  %v1044 = vpop.permute.xlu0 %1043
  %1045 = vrot.lane.b32.xlu0 %v62, 1
  %v1046 = vpop.permute.xlu0 %1045
  %1047 = vrot.lane.b32.xlu0 %v63, 1
  %v1048 = vpop.permute.xlu0 %1047
  %1049 = vrot.lane.b32.xlu0 %v64, 1
  %v1050 = vpop.permute.xlu0 %1049
  %1051 = vrot.lane.b32.xlu0 %v65, 1
  %v1052 = vpop.permute.xlu0 %1051
  %1053 = vrot.lane.b32.xlu0 %v66, 1
  %v1054 = vpop.permute.xlu0 %1053
  %1055 = vrot.lane.b32.xlu0 %v67, 1
  %v1056 = vpop.permute.xlu0 %1055
  %1057 = vrot.lane.b32.xlu0 %v68, 1
  %v1058 = vpop.permute.xlu0 %1057
  %1059 = vrot.lane.b32.xlu0 %v69, 1
  %v1060 = vpop.permute.xlu0 %1059
  %1061 = vrot.lane.b32.xlu0 %v70, 1
  %v1062 = vpop.permute.xlu0 %1061
  %1063 = vrot.lane.b32.xlu0 %v71, 1
  %v1064 = vpop.permute.xlu0 %1063
  %1065 = vrot.lane.b32.xlu0 %v72, 1
  %v1066 = vpop.permute.xlu0 %1065
  %1067 = vrot.lane.b32.xlu0 %v73, 1
  %v1068 = vpop.permute.xlu0 %1067
  %1069 = vrot.lane.b32.xlu0 %v74, 1
  %v1070 = vpop.permute.xlu0 %1069
  %v1087 = vmul.f32 %v881, %v1040
  %v1088 = vmul.f32 %v884, %v1042
  %v1089 = vmul.f32 %v889, %v1044
  %v1090 = vmul.f32 %v892, %v1046
  %v1091 = vmul.f32 %v897, %v1048
  %v1092 = vmul.f32 %v900, %v1050
  %v1093 = vmul.f32 %v905, %v1052
  %v1094 = vmul.f32 %v908, %v1054
  %v1095 = vmul.f32 %v913, %v1056
  %v1096 = vmul.f32 %v916, %v1058
  %v1097 = vmul.f32 %v921, %v1060
  %v1098 = vmul.f32 %v924, %v1062
  %v1099 = vmul.f32 %v929, %v1064
  %v1100 = vmul.f32 %v932, %v1066
  %v1101 = vmul.f32 %v937, %v1068
  %v1102 = vmul.f32 %v940, %v1070
  %1103 = vrot.lane.b32.xlu0 %v59, 127
  %v1104 = vpop.permute.xlu0 %1103
  %1105 = vrot.lane.b32.xlu0 %v60, 127
  %v1106 = vpop.permute.xlu0 %1105
  %1107 = vrot.lane.b32.xlu0 %v61, 127
  %v1108 = vpop.permute.xlu0 %1107
  %1109 = vrot.lane.b32.xlu0 %v62, 127
  %v1110 = vpop.permute.xlu0 %1109
  %1111 = vrot.lane.b32.xlu0 %v63, 127
  %v1112 = vpop.permute.xlu0 %1111
  %1113 = vrot.lane.b32.xlu0 %v64, 127
  %v1114 = vpop.permute.xlu0 %1113
  %1115 = vrot.lane.b32.xlu0 %v65, 127
  %v1116 = vpop.permute.xlu0 %1115
  %1117 = vrot.lane.b32.xlu0 %v66, 127
  %v1118 = vpop.permute.xlu0 %1117
  %1119 = vrot.lane.b32.xlu0 %v67, 127
  %v1120 = vpop.permute.xlu0 %1119
  %1121 = vrot.lane.b32.xlu0 %v68, 127
  %v1122 = vpop.permute.xlu0 %1121
  %1123 = vrot.lane.b32.xlu0 %v69, 127
  %v1124 = vpop.permute.xlu0 %1123
  %1125 = vrot.lane.b32.xlu0 %v70, 127
  %v1126 = vpop.permute.xlu0 %1125
  %1127 = vrot.lane.b32.xlu0 %v71, 127
  %v1128 = vpop.permute.xlu0 %1127
  %1129 = vrot.lane.b32.xlu0 %v72, 127
  %v1130 = vpop.permute.xlu0 %1129
  %1131 = vrot.lane.b32.xlu0 %v73, 127
  %v1132 = vpop.permute.xlu0 %1131
  %1133 = vrot.lane.b32.xlu0 %v74, 127
  %v1134 = vpop.permute.xlu0 %1133
  %v1151 = vmul.f32 %v881, %v1104
  %v1152 = vmul.f32 %v884, %v1106
  %v1153 = vmul.f32 %v889, %v1108
  %v1154 = vmul.f32 %v892, %v1110
  %v1155 = vmul.f32 %v897, %v1112
  %v1156 = vmul.f32 %v900, %v1114
  %v1157 = vmul.f32 %v905, %v1116
  %v1158 = vmul.f32 %v908, %v1118
  %v1159 = vmul.f32 %v913, %v1120
  %v1160 = vmul.f32 %v916, %v1122
  %v1161 = vmul.f32 %v921, %v1124
  %v1162 = vmul.f32 %v924, %v1126
  %v1163 = vmul.f32 %v929, %v1128
  %v1164 = vmul.f32 %v932, %v1130
  %v1165 = vmul.f32 %v937, %v1132
  %v1166 = vmul.f32 %v940, %v1134
  %1183 = vrot.lane.b32.xlu0 %v1151, 1
  %v1184 = vpop.permute.xlu0 %1183
  %1185 = vrot.lane.b32.xlu0 %v1152, 1
  %v1186 = vpop.permute.xlu0 %1185
  %1187 = vrot.lane.b32.xlu0 %v1153, 1
  %v1188 = vpop.permute.xlu0 %1187
  %1189 = vrot.lane.b32.xlu0 %v1154, 1
  %v1190 = vpop.permute.xlu0 %1189
  %1191 = vrot.lane.b32.xlu0 %v1155, 1
  %v1192 = vpop.permute.xlu0 %1191
  %1193 = vrot.lane.b32.xlu0 %v1156, 1
  %v1194 = vpop.permute.xlu0 %1193
  %1195 = vrot.lane.b32.xlu0 %v1157, 1
  %v1196 = vpop.permute.xlu0 %1195
  %1197 = vrot.lane.b32.xlu0 %v1158, 1
  %v1198 = vpop.permute.xlu0 %1197
  %1199 = vrot.lane.b32.xlu0 %v1159, 1
  %v1200 = vpop.permute.xlu0 %1199
  %1201 = vrot.lane.b32.xlu0 %v1160, 1
  %v1202 = vpop.permute.xlu0 %1201
  %1203 = vrot.lane.b32.xlu0 %v1161, 1
  %v1204 = vpop.permute.xlu0 %1203
  %1205 = vrot.lane.b32.xlu0 %v1162, 1
  %v1206 = vpop.permute.xlu0 %1205
  %1207 = vrot.lane.b32.xlu0 %v1163, 1
  %v1208 = vpop.permute.xlu0 %1207
  %1209 = vrot.lane.b32.xlu0 %v1164, 1
  %v1210 = vpop.permute.xlu0 %1209
  %1211 = vrot.lane.b32.xlu0 %v1165, 1
  %v1212 = vpop.permute.xlu0 %1211
  %1213 = vrot.lane.b32.xlu0 %v1166, 1
  %v1214 = vpop.permute.xlu0 %1213
  %v1231 = vsub.f32 %v1087, %v1184
  %v1232 = vsub.f32 %v1088, %v1186
  %v1233 = vsub.f32 %v1089, %v1188
  %v1234 = vsub.f32 %v1090, %v1190
  %v1235 = vsub.f32 %v1091, %v1192
  %v1236 = vsub.f32 %v1092, %v1194
  %v1237 = vsub.f32 %v1093, %v1196
  %v1238 = vsub.f32 %v1094, %v1198
  %v1239 = vsub.f32 %v1095, %v1200
  %v1240 = vsub.f32 %v1096, %v1202
  %v1241 = vsub.f32 %v1097, %v1204
  %v1242 = vsub.f32 %v1098, %v1206
  %v1243 = vsub.f32 %v1099, %v1208
  %v1244 = vsub.f32 %v1100, %v1210
  %v1245 = vsub.f32 %v1101, %v1212
  %v1246 = vsub.f32 %v1102, %v1214
  %vm1247 = vcmask 7168
  %v1248 = vsel %vm1247, %v1023, %v1231
  %v1249 = vsel %vm1247, %v1024, %v1232
  %v1250 = vsel %vm1247, %v1025, %v1233
  %v1251 = vsel %vm1247, %v1026, %v1234
  %v1252 = vsel %vm1247, %v1027, %v1235
  %v1253 = vsel %vm1247, %v1028, %v1236
  %v1254 = vsel %vm1247, %v1029, %v1237
  %v1255 = vsel %vm1247, %v1030, %v1238
  %v1256 = vsel %vm1247, %v1031, %v1239
  %v1257 = vsel %vm1247, %v1032, %v1240
  %v1258 = vsel %vm1247, %v1033, %v1241
  %v1259 = vsel %vm1247, %v1034, %v1242
  %v1260 = vsel %vm1247, %v1035, %v1243
  %v1261 = vsel %vm1247, %v1036, %v1244
  %v1262 = vsel %vm1247, %v1037, %v1245
  %v1263 = vsel %vm1247, %v1038, %v1246
  %vm1264 = vcmask 15360
  %1265 = vst.msk [vmem:[%s7] sm:$0xff] %vm1264, %v1248
  %1266 = vst.msk [vmem:[%s7 + $0x8] sm:$0xff] %vm1264, %v1249
  %1267 = vst.msk [vmem:[%s7 + $0x10] sm:$0xff] %vm1264, %v1250
  %1268 = vst.msk [vmem:[%s7 + $0x18] sm:$0xff] %vm1264, %v1251
  %1269 = vst.msk [vmem:[%s7 + $0x20] sm:$0xff] %vm1264, %v1252
  %1270 = vst.msk [vmem:[%s7 + $0x28] sm:$0xff] %vm1264, %v1253
  %1271 = vst.msk [vmem:[%s7 + $0x30] sm:$0xff] %vm1264, %v1254
  %1272 = vst.msk [vmem:[%s7 + $0x38] sm:$0xff] %vm1264, %v1255
  %1273 = vst.msk [vmem:[%s7 + $0x40] sm:$0xff] %vm1264, %v1256
  %1274 = vst.msk [vmem:[%s7 + $0x48] sm:$0xff] %vm1264, %v1257
  %1275 = vst.msk [vmem:[%s7 + $0x50] sm:$0xff] %vm1264, %v1258
  %1276 = vst.msk [vmem:[%s7 + $0x58] sm:$0xff] %vm1264, %v1259
  %1277 = vst.msk [vmem:[%s7 + $0x60] sm:$0xff] %vm1264, %v1260
  %1278 = vst.msk [vmem:[%s7 + $0x68] sm:$0xff] %vm1264, %v1261
  %1279 = vst.msk [vmem:[%s7 + $0x70] sm:$0xff] %vm1264, %v1262
  %1280 = vst.msk [vmem:[%s7 + $0x78] sm:$0xff] %vm1264, %v1263
  // Predicated region
  $region30: #{tpu_custom_call.1} parent=0 // pred_check
    _
  $region31: #{tpu_custom_call.1} parent=0 // pred_check_branch
    %1282 = sbr.rel (0) target = $region33
  $region32: #{tpu_custom_call.1} parent=0 // pred_region
    _
  $region33: #{tpu_custom_call.1} parent=0 // pred_fallthru
    _
  // Predicated region
  $region34: #{tpu_custom_call.1} parent=0 // pred_check
    _
  $region35: #{tpu_custom_call.1} parent=0 // pred_check_branch
    %1284 = sbr.rel (0) target = $region37
  $region36: #{tpu_custom_call.1} parent=0 // pred_region
    _
  $region37: #{tpu_custom_call.1} parent=0 // pred_fallthru
    _

</llo_original>
